<compile_context>
chip_gen: v7x
topology: tpu7x:2x2x1
jax: 0.10.0
libtpu: 0.0.40
codegen_flags: <defaults>
</compile_context>

<pallas_src>
import functools

import jax
import jax.numpy as jnp
from jax.experimental import pallas as pl
from jax.experimental.pallas import tpu as pltpu


# --------------------------------------------------------------------------
# Pallas kernel: relu -> linear -> log_softmax (narrow, real-class output)
# --------------------------------------------------------------------------
def _ltlf_head_kernel(x_ref, w_ref, b_ref, o_ref, *, num_classes):
    # x_ref : (TILE_B, embed_dim)    f32 VMEM   (streamed per grid step)
    # w_ref : (embed_dim, C_pad)     f32 VMEM   (pre-transposed, resident)
    # b_ref : (1, num_classes)       f32 VMEM   (resident)
    # o_ref : (TILE_B, num_classes)  f32 VMEM   (narrow output tile)
    x = jnp.maximum(x_ref[...], 0.0)                                   # relu (VPU)
    logits = jnp.dot(x, w_ref[...], preferred_element_type=jnp.float32)  # MXU, 128-wide N
    # Keep only the real class lanes *before* the softmax: padded W columns
    # never enter the math, no mask / -1e30 bias needed.
    z = logits[:, :num_classes] + b_ref[...]                           # (TILE_B, nc)
    m = jnp.max(z, axis=1, keepdims=True)                              # log_softmax
    s = z - m
    lse = jnp.log(jnp.sum(jnp.exp(s), axis=1, keepdims=True))
    o_ref[...] = s - lse


def _round_up(n, m):
    return ((n + m - 1) // m) * m


@functools.partial(jax.jit, static_argnames=("num_classes", "tile_b"))
def ltlf_head(x, w_t_pad, b, *, num_classes, tile_b=4096):
    """x: (bs, embed_dim) f32; w_t_pad: (embed_dim, C_pad) f32; b: (1, num_classes) f32."""
    bs, embed_dim = x.shape
    c_pad = w_t_pad.shape[1]

    # Batch tile: at most tile_b rows, at least an 8-row sublane multiple.
    tb = min(tile_b, _round_up(bs, 8))
    # No host-side padding: ragged tail block handled by Pallas boundary masking.
    grid = (pl.cdiv(bs, tb),)

    kernel = functools.partial(_ltlf_head_kernel, num_classes=num_classes)

    return pl.pallas_call(
        kernel,
        out_shape=jax.ShapeDtypeStruct((bs, num_classes), jnp.float32),
        grid=grid,
        in_specs=[
            pl.BlockSpec((tb, embed_dim), lambda i: (i, 0)),        # x tiles (streamed)
            pl.BlockSpec((embed_dim, c_pad), lambda i: (0, 0)),     # W resident (64 KiB)
            pl.BlockSpec((1, num_classes), lambda i: (0, 0)),       # b resident
        ],
        # Narrow, last-dim == full-dim output block: bytes drop 64x vs 128-lane slab.
        out_specs=pl.BlockSpec((tb, num_classes), lambda i: (i, 0)),
        compiler_params=pltpu.CompilerParams(
            dimension_semantics=("parallel",),                      # batch split on v7x megacore
        ),
    )(x, w_t_pad, b)


# --------------------------------------------------------------------------
# Parameter / input construction (deterministic, in-script)
# --------------------------------------------------------------------------
def make_params(key, embed_dim, num_classes, c_pad):
    """nn.Linear(embed_dim, num_classes)-style deterministic init."""
    kw, kb = jax.random.split(key)
    bound = 1.0 / jnp.sqrt(embed_dim)
    w = jax.random.uniform(kw, (num_classes, embed_dim), jnp.float32, -bound, bound)
    b = jax.random.uniform(kb, (1, num_classes), jnp.float32, -bound, bound)
    # Pre-transpose; zero-pad classes to c_pad lanes for a 128-wide MXU matmul.
    # (Kernel slices to the real classes before softmax, so pad values are inert.)
    w_t_pad = jnp.zeros((embed_dim, c_pad), jnp.float32).at[:, :num_classes].set(w.T)
    return w, b, w_t_pad


def make_onehot_batch(key, bs, var_num, embed_dim):
    """Glue equivalent of embed_atom(): one-hot rows at randperm(var_num)+1."""
    var_idx = jax.random.permutation(key, var_num) + 1   # indices in [1, var_num]
    idx = var_idx[jnp.arange(bs) % var_num]
    return jax.nn.one_hot(idx, embed_dim, dtype=jnp.float32)


def reference(x, w, b):
    return jax.nn.log_softmax(jnp.maximum(x, 0.0) @ w.T + b, axis=1)


if __name__ == "__main__":
    # Small shapes consistent with the module: embed_dim = var_num + 1.
    var_num = 127
    embed_dim = var_num + 1       # 128 (lane-aligned)
    num_classes = 2
    c_pad = 128                   # pad classes to one lane-width for the MXU
    bs = 8

    key = jax.random.PRNGKey(0)
    k_params, k_e1, k_e2, k_e3 = jax.random.split(key, 4)

    w, b, w_t_pad = make_params(k_params, embed_dim, num_classes, c_pad)

    # --- primary small-batch check (single grid step) ---
    x = make_onehot_batch(k_e1, bs, var_num, embed_dim)               # (8, 128)
    out = jax.block_until_ready(ltlf_head(x, w_t_pad, b, num_classes=num_classes))
    ref = reference(x, w, b)
    assert out.shape == (bs, num_classes)
    assert jnp.allclose(out, ref, atol=1e-5, rtol=1e-5), "mismatch vs reference (bs=8)"

    # --- multi-tile check: exercises batch grid + ragged tail block
    #     (bs not a multiple of the tile), no host-side padding ---
    bs2 = 1040
    x2 = make_onehot_batch(k_e2, bs2, var_num, embed_dim)
    out2 = jax.block_until_ready(
        ltlf_head(x2, w_t_pad, b, num_classes=num_classes, tile_b=512))
    ref2 = reference(x2, w, b)
    assert out2.shape == (bs2, num_classes)
    assert jnp.allclose(out2, ref2, atol=1e-5, rtol=1e-5), "mismatch vs reference (bs=1040)"

    # --- non-multiple-of-8 batch: single over-covering block, masked writes ---
    bs3 = 237
    x3 = make_onehot_batch(k_e3, bs3, var_num, embed_dim)
    out3 = jax.block_until_ready(ltlf_head(x3, w_t_pad, b, num_classes=num_classes))
    ref3 = reference(x3, w, b)
    assert out3.shape == (bs3, num_classes)
    assert jnp.allclose(out3, ref3, atol=1e-5, rtol=1e-5), "mismatch vs reference (bs=237)"

    print("KERNEL_OK")
</pallas_src>

<mosaic_0001>
module attributes {stable_mosaic.version = 11 : i64} {
  func.func @_ltlf_head_kernel(%arg0: i32, %arg1: memref<8x128xf32, #tpu.memory_space<vmem>>, %arg2: memref<128x128xf32, #tpu.memory_space<vmem>>, %arg3: memref<1x2xf32, #tpu.memory_space<vmem>>, %arg4: memref<8x2xf32, #tpu.memory_space<vmem>>) attributes {dimension_semantics = [#tpu.dimension_semantics<parallel>], iteration_bounds = array<i64: 1>, scalar_prefetch = 0 : i64, scratch_operands = 0 : i64, tpu.core_type = #tpu.core_type<tc>, window_params = [{transform_indices = @transform_0, window_bounds = array<i64: 8, 128>}, {pipeline_mode = #tpu.pipeline_mode<synchronous>, transform_indices = @transform_1, window_bounds = array<i64: 128, 128>}, {pipeline_mode = #tpu.pipeline_mode<synchronous>, transform_indices = @transform_2, window_bounds = array<i64: 1, 2>}, {transform_indices = @transform_3, window_bounds = array<i64: 8, 2>}]} {
    %c0 = arith.constant 0 : index
    %c0_0 = arith.constant 0 : index
    %0 = vector.load %arg1[%c0, %c0_0] : memref<8x128xf32, #tpu.memory_space<vmem>>, vector<8x128xf32>
    %cst = arith.constant 0.000000e+00 : f32
    %1 = vector.broadcast %cst : f32 to vector<8x128xf32>
    %2 = arith.maximumf %0, %1 : vector<8x128xf32>
    %c0_1 = arith.constant 0 : index
    %c0_2 = arith.constant 0 : index
    %3 = vector.load %arg2[%c0_1, %c0_2] : memref<128x128xf32, #tpu.memory_space<vmem>>, vector<128x128xf32>
    %cst_3 = arith.constant dense<0.000000e+00> : vector<8x128xf32>
    %4 = tpu.matmul %2, %3, %cst_3 {dimension_numbers = #tpu.dot_dimension_numbers<[1], [0], [0], [1], [0, 0, 1, 1], [], []>} : vector<8x128xf32>, vector<128x128xf32>, vector<8x128xf32> -> vector<8x128xf32>
    %5 = vector.extract_strided_slice %4 {offsets = [0, 0], sizes = [8, 2], strides = [1, 1]} : vector<8x128xf32> to vector<8x2xf32>
    %c0_4 = arith.constant 0 : index
    %c0_5 = arith.constant 0 : index
    %6 = vector.load %arg3[%c0_4, %c0_5] : memref<1x2xf32, #tpu.memory_space<vmem>>, vector<1x2xf32>
    %7 = vector.broadcast %6 : vector<1x2xf32> to vector<8x2xf32>
    %8 = arith.addf %5, %7 : vector<8x2xf32>
    %cst_6 = arith.constant dense<0xFF800000> : vector<8xf32>
    %9 = vector.multi_reduction <maximumf>, %8, %cst_6 [1] : vector<8x2xf32> to vector<8xf32>
    %10 = vector.shape_cast %9 : vector<8xf32> to vector<8x1xf32>
    %11 = vector.broadcast %10 : vector<8x1xf32> to vector<8x2xf32>
    %12 = arith.subf %8, %11 : vector<8x2xf32>
    %13 = math.exp %12 : vector<8x2xf32>
    %cst_7 = arith.constant dense<0.000000e+00> : vector<8xf32>
    %14 = vector.multi_reduction <add>, %13, %cst_7 [1] : vector<8x2xf32> to vector<8xf32>
    %15 = vector.shape_cast %14 : vector<8xf32> to vector<8x1xf32>
    %16 = math.log %15 : vector<8x1xf32>
    %17 = vector.broadcast %16 : vector<8x1xf32> to vector<8x2xf32>
    %18 = arith.subf %12, %17 : vector<8x2xf32>
    %c0_8 = arith.constant 0 : index
    %c0_9 = arith.constant 0 : index
    %19 = vector.load %arg4[%c0_8, %c0_9] : memref<8x2xf32, #tpu.memory_space<vmem>>, vector<8x2xf32>
    tpu.vector_store %arg4[%c0_8, %c0_9], %18 {strides = array<i32>} : memref<8x2xf32, #tpu.memory_space<vmem>>, vector<8x2xf32>,
    return
  }
  func.func @transform_0(%arg0: i32) -> (i32, i32) {
    %c0_i32 = arith.constant 0 : i32
    %c0_i32_0 = arith.constant 0 : i32
    return %arg0, %c0_i32 : i32, i32
  }
  func.func @transform_1(%arg0: i32) -> (i32, i32) {
    %c0_i32 = arith.constant 0 : i32
    %c0_i32_0 = arith.constant 0 : i32
    %c0_i32_1 = arith.constant 0 : i32
    return %c0_i32, %c0_i32_0 : i32, i32
  }
  func.func @transform_2(%arg0: i32) -> (i32, i32) {
    %c0_i32 = arith.constant 0 : i32
    %c0_i32_0 = arith.constant 0 : i32
    %c0_i32_1 = arith.constant 0 : i32
    return %c0_i32, %c0_i32_0 : i32, i32
  }
  func.func @transform_3(%arg0: i32) -> (i32, i32) {
    %c0_i32 = arith.constant 0 : i32
    %c0_i32_0 = arith.constant 0 : i32
    return %arg0, %c0_i32 : i32, i32
  }
}

</mosaic_0001>

<llo_original>
// kernel: ltlf_head.1
$region0: #{ltlf_head.1}
  #allocation0 [shape = 'u32[]', space=smem, size = 0x4, offset = 0x4, fixed_abs, tag = 'smem constant byte address 0x4 - core index']
  #allocation1 [shape = 'u32[144,128]{1,0:T(1,128)}', space=vmem, size = 0x12000, scoped, tag = 'internal scratch']
  %s0 = inlined_call_operand.hbm [shape: f32[8,128], index: 0, kind: input, shape index: {}]
  %s1 = inlined_call_operand.hbm [shape: f32[128,128], index: 1, kind: input, shape index: {}]
  %s2 = inlined_call_operand.vmem [shape: f32[1,2], index: 2, kind: input, shape index: {}]
  %s3 = inlined_call_operand.vmem [shape: f32[8,2], index: 3, kind: output, shape index: {}]
  %s4 = sld [smem:[#allocation0]]
  $region30: #{ltlf_head.1} parent=0
    _
  %s6 = ssub.s32 1, %s4
  %s7 = scalar_select 0, %s6, %s4
  $region1: #{ltlf_head.1} parent=0
    #allocation2 [shape = 'u8[4096]{0}', space=vmem, size = 0x1000, scoped, tag = 'input window, operand 0, single buffered']
    #allocation3 [shape = 's32[1]{0}', space=sflag, size = 0x4, scoped, tag = 'scoped memory for ltlf_head.1']
    #allocation4 [shape = 'u8[65536]{0}', space=vmem, size = 0x10000, scoped, tag = 'input window, operand 1, single buffered']
    #allocation5 [shape = 's32[1]{0}', space=sflag, size = 0x4, scoped, tag = 'scoped memory for ltlf_head.1']
    %8 = vsyncpa [#allocation3], 0
    %9 = vsyncpa [#allocation5], 0
    // Predicated region
    $region2: #{ltlf_head.1} parent=1 // pred_check
      _
    $region3: #{ltlf_head.1} parent=1 // pred_check_branch
      %11 = sbr.rel (0) target = $region5
    $region4: #{ltlf_head.1} parent=1 // pred_region
      %s13 = ssub.s32 128, 128
      %14 = vsyncadd [#allocation3], %s13
      %s16 = sshll.u32 [#allocation2], 4
      %s17 = int_to_ptr.vmem [resolvable:$true] %s16
      %19 = dma.hbm_to_vmem [thread:$0]  %s0, 128, %s17, [#allocation3]
    $region5: #{ltlf_head.1} parent=1 // pred_fallthru
      _
    // Predicated region
    $region6: #{ltlf_head.1} parent=1 // pred_check
      _
    $region7: #{ltlf_head.1} parent=1 // pred_check_branch
      %21 = sbr.rel (0) target = $region9
    $region8: #{ltlf_head.1} parent=1 // pred_region
      %s23 = ssub.s32 2048, 2048
      %24 = vsyncadd [#allocation5], %s23
      %s25 = sshll.u32 [#allocation4], 4
      %s26 = int_to_ptr.vmem [resolvable:$true] %s25
      %31 = dma.hbm_to_vmem [thread:$0]  %s1, 2048, %s26, [#allocation5], 128, 128, 8
    $region9: #{ltlf_head.1} parent=1 // pred_fallthru
      _
    // Predicated region
    $region10: #{ltlf_head.1} parent=1 // pred_check
      _
    $region11: #{ltlf_head.1} parent=1 // pred_check_branch
      %33 = sbr.rel (0) target = $region13
    $region12: #{ltlf_head.1} parent=1 // pred_region
      _
    $region13: #{ltlf_head.1} parent=1 // pred_fallthru
      _
    // Predicated region
    $region14: #{ltlf_head.1} parent=1 // pred_check
      _
    $region15: #{ltlf_head.1} parent=1 // pred_check_branch
      %35 = sbr.rel (0) target = $region17
    $region16: #{ltlf_head.1} parent=1 // pred_region
      %36 = dma.done [#allocation3], 128
    $region17: #{ltlf_head.1} parent=1 // pred_fallthru
      _
    // Predicated region
    $region18: #{ltlf_head.1} parent=1 // pred_check
      _
    $region19: #{ltlf_head.1} parent=1 // pred_check_branch
      %38 = sbr.rel (0) target = $region21
    $region20: #{ltlf_head.1} parent=1 // pred_region
      %39 = dma.done [#allocation5], 2048
    $region21: #{ltlf_head.1} parent=1 // pred_fallthru
      _
    %v40 = vld [vmem:[#allocation2] sm:$0xff]
    %v41 = vmax.f32 %v40, 0.0
    %v42 = vld [vmem:[#allocation4] sm:$0xff]
    %v43 = vld [vmem:[#allocation4 + $0x8] sm:$0xff]
    %v44 = vld [vmem:[#allocation4 + $0x10] sm:$0xff]
    %v45 = vld [vmem:[#allocation4 + $0x18] sm:$0xff]
    %v46 = vld [vmem:[#allocation4 + $0x20] sm:$0xff]
    %v47 = vld [vmem:[#allocation4 + $0x28] sm:$0xff]
    %v48 = vld [vmem:[#allocation4 + $0x30] sm:$0xff]
    %v49 = vld [vmem:[#allocation4 + $0x38] sm:$0xff]
    %v50 = vld [vmem:[#allocation4 + $0x40] sm:$0xff]
    %v51 = vld [vmem:[#allocation4 + $0x48] sm:$0xff]
    %v52 = vld [vmem:[#allocation4 + $0x50] sm:$0xff]
    %v53 = vld [vmem:[#allocation4 + $0x58] sm:$0xff]
    %v54 = vld [vmem:[#allocation4 + $0x60] sm:$0xff]
    %v55 = vld [vmem:[#allocation4 + $0x68] sm:$0xff]
    %v56 = vld [vmem:[#allocation4 + $0x70] sm:$0xff]
    %v57 = vld [vmem:[#allocation4 + $0x78] sm:$0xff]
    %58 = vmatprep.subr.mxu0 0.0
    %59 = vmatpush1.msra.mxu0 %v42
    %60 = vmatprep.subr.mxu0 0.0
    %61 = vmatpush1.msra.mxu0 %v43
    %62 = vmatprep.subr.mxu0 0.0
    %63 = vmatpush1.msra.mxu0 %v44
    %64 = vmatprep.subr.mxu0 0.0
    %65 = vmatpush1.msra.mxu0 %v45
    %66 = vmatprep.subr.mxu0 0.0
    %67 = vmatpush1.msra.mxu0 %v46
    %68 = vmatprep.subr.mxu0 0.0
    %69 = vmatpush1.msra.mxu0 %v47
    %70 = vmatprep.subr.mxu0 0.0
    %71 = vmatpush1.msra.mxu0 %v48
    %72 = vmatprep.subr.mxu0 0.0
    %73 = vmatpush1.msra.mxu0 %v49
    %74 = vmatprep.subr.mxu0 0.0
    %75 = vmatpush1.msra.mxu0 %v50
    %76 = vmatprep.subr.mxu0 0.0
    %77 = vmatpush1.msra.mxu0 %v51
    %78 = vmatprep.subr.mxu0 0.0
    %79 = vmatpush1.msra.mxu0 %v52
    %80 = vmatprep.subr.mxu0 0.0
    %81 = vmatpush1.msra.mxu0 %v53
    %82 = vmatprep.subr.mxu0 0.0
    %83 = vmatpush1.msra.mxu0 %v54
    %84 = vmatprep.subr.mxu0 0.0
    %85 = vmatpush1.msra.mxu0 %v55
    %86 = vmatprep.subr.mxu0 0.0
    %87 = vmatpush1.msra.mxu0 %v56
    %88 = vmatprep.subr.mxu0 0.0
    %89 = vmatpush1.msra.mxu0 %v57
    %90 = vmatprep.subr.mxu0 0.0
    %91 = vmatpush1.msra.mxu0 0.0
    %92 = vmatprep.subr.mxu0 0.0
    %93 = vmatpush1.msra.mxu0 0.0
    %94 = vmatprep.subr.mxu0 0.0
    %95 = vmatpush1.msra.mxu0 0.0
    %96 = vmatprep.subr.mxu0 0.0
    %97 = vmatpush1.msra.mxu0 0.0
    %98 = vmatprep.subr.mxu0 0.0
    %99 = vmatpush1.msra.mxu0 0.0
    %100 = vmatprep.subr.mxu0 0.0
    %101 = vmatpush1.msra.mxu0 0.0
    %102 = vmatprep.subr.mxu0 0.0
    %103 = vmatpush1.msra.mxu0 0.0
    %104 = vmatprep.subr.mxu0 0.0
    %105 = vmatpush1.msra.mxu0 0.0
    %106 = vmatprep.subr.mxu0 0.0
    %107 = vmatpush1.msra.mxu0 0.0
    %108 = vmatprep.subr.mxu0 0.0
    %109 = vmatpush1.msra.mxu0 0.0
    %110 = vmatprep.subr.mxu0 0.0
    %111 = vmatpush1.msra.mxu0 0.0
    %112 = vmatprep.subr.mxu0 0.0
    %113 = vmatpush1.msra.mxu0 0.0
    %114 = vmatprep.subr.mxu0 0.0
    %115 = vmatpush1.msra.mxu0 0.0
    %116 = vmatprep.subr.mxu0 0.0
    %117 = vmatpush1.msra.mxu0 0.0
    %118 = vmatprep.subr.mxu0 0.0
    %119 = vmatpush1.msra.mxu0 0.0
    %120 = vmatprep.subr.mxu0 0.0
    %121 = vmatpush1.msra.mxu0 0.0
    %122 = vmatprep.mubr.f32.mxu0 0.0
    %123 = vmatmul.mubr.f32.gmra.mrb[0].mxu0 %v41
    %v124 = vpop.f32.mrb[0].mxu0
    %v125 = vadd.f32 0.0, %v124
    %v126 = vpop.f32.mrb[0].mxu0
    %127 = vdwg.mxu0
    %v128 = vld [vmem:[%s2] sm:$0x1]
    %v130 = vlaneseq
    %v131 = vshrl.u32 %v130, 7
    %v132 = vsub.s32 0, %v131
    %v133 = vrot.slane %v128, %v132
    %v135 = vadd.f32 %v125, %v133
    %vm136 = vcmask 15360
    %v137 = vsel %vm136, %v135, -inf
    %138 = vmax.xlane.f32.xlu0 %v137
    %v139 = vpop.xlane.xlu0 %138
    %v140 = vsub.f32 %v135, %v139
    %v141 = vmul.f32 %v140, 1.442695
    %v142 = vpow.pop %v141
    %v143 = vsel %vm136, %v142, 0.0
    %144 = vadd.xlane.f32.xlu0 %v143
    %v145 = vpop.xlane.xlu0 %144
    %v146 = vlog2.pop %v145
    %v147 = vmul.f32 %v146, 0.6931472
    %v148 = vsub.f32 %v140, %v147
    %149 = vst.msk [vmem:[%s3] sm:$0xff] %vm136, %v148
    // Predicated region
    $region22: #{ltlf_head.1} parent=1 // pred_check
      _
    $region23: #{ltlf_head.1} parent=1 // pred_check_branch
      %151 = sbr.rel (0) target = $region25
    $region24: #{ltlf_head.1} parent=1 // pred_region
      _
    $region25: #{ltlf_head.1} parent=1 // pred_fallthru
      _
    // Predicated region
    $region26: #{ltlf_head.1} parent=1 // pred_check
      _
    $region27: #{ltlf_head.1} parent=1 // pred_check_branch
      %153 = sbr.rel (0) target = $region29
    $region28: #{ltlf_head.1} parent=1 // pred_region
      _
    $region29: #{ltlf_head.1} parent=1 // pred_fallthru
      _
    %154 = vsyncpa [#allocation3], 1
    %155 = vsyncpa [#allocation5], 1

</llo_original>
